<compile_context>
chip_gen: v7x
topology: tpu7x:2x2x1
jax: 0.10.0
libtpu: 0.0.40
codegen_flags: <defaults>
</compile_context>

<pallas_src>
import jax
import jax.numpy as jnp
from jax.experimental import pallas as pl
from jax.experimental.pallas import tpu as pltpu

EPS = 1e-5

# VMEM budgeting: a 48 MiB scoped limit is safe on every generation (v7x has
# 64 MiB physical per core; v5e/v6e have 128 MiB) and raises the low scoped
# defaults.  Tiles are sized against a smaller working budget for headroom.
_VMEM_LIMIT_BYTES = 48 << 20
_VMEM_TILE_BUDGET = 36 << 20
_TARGET_BLOCK_BYTES = 2 << 20      # ~2 MiB of f32 x per grid step
_MIN_BLOCK_BYTES = 512 << 10       # don't shrink blocks below this for step count


def residual_kernel(x_ref, w_ref, b_ref, g_ref, beta_ref, o_ref):
    # x_ref: (TM, D) f32   w_ref: (D, D) bf16 (in, out)   b/g/beta: (1, D) f32
    x = x_ref[...]                                    # f32, no redundant cast

    # Sublayer: Linear(D, D) on the MXU. bf16 operands, f32 accumulate.
    h = jnp.dot(x.astype(jnp.bfloat16), w_ref[...],
                preferred_element_type=jnp.float32) + b_ref[...]

    # Dropout: identity (eval mode).
    # TODO(synk): training-mode dropout (pltpu.prng_random_bits mask) omitted.

    # Residual add (f32)
    y = x + h

    # LayerNorm over last dim (biased variance, like nn.LayerNorm), all f32.
    mean = jnp.mean(y, axis=-1, keepdims=True)
    cen = y - mean
    var = jnp.mean(cen * cen, axis=-1, keepdims=True)
    inv = jax.lax.rsqrt(var + EPS)
    o_ref[...] = (cen * inv * g_ref[...] + beta_ref[...]).astype(o_ref.dtype)


def _round_down8(v: int) -> int:
    return max(8, (v // 8) * 8)


def _round_up8(v: int) -> int:
    return ((v + 7) // 8) * 8


def _pick_tile_rows(rows: int, d: int) -> int:
    """Row tile: ~2 MiB of x per step, VMEM-capped, multiple of 8 sublanes."""
    rows8 = _round_up8(rows)

    # Bytes-per-step target (f32 rows of width d).
    tm = _round_down8(_TARGET_BLOCK_BYTES // (4 * d))

    # VMEM cap: 2 input + 2 output f32 (tm, d) buffers, single-buffered bf16
    # weight (d, d), small params.
    avail = _VMEM_TILE_BUDGET - 2 * d * d - 6 * 4 * d
    if avail > 0:
        tm = min(tm, _round_down8(avail // (16 * d)))
    else:
        tm = 8  # TODO(synk): K-tiled accumulation variant for very large D.

    tm = min(tm, rows8)

    # Prefer >= 8 grid steps (pipelining + v7x's 2 TensorCores) as long as
    # blocks stay >= ~512 KiB; otherwise bytes-per-step wins.
    if rows8 // tm < 8:
        alt = _round_down8(rows8 // 8)
        min_block_rows = _round_down8(_MIN_BLOCK_BYTES // (4 * d))
        if alt >= min_block_rows:
            tm = min(tm, alt)

    return max(8, tm)


def _invariant_spec(shape):
    """Grid-invariant operand: constant index_map, single-buffered."""
    idx = lambda i: (0,) * len(shape)
    if hasattr(pl, "Buffered"):
        try:
            return pl.BlockSpec(shape, idx, pipeline_mode=pl.Buffered(1))
        except (TypeError, ValueError):
            pass
    return pl.BlockSpec(shape, idx)


def prepare_params(w_out_in, b, gamma, beta):
    """One-time parameter prep, hoisted out of the per-call forward path.

    w_out_in follows torch.nn.Linear layout (out_features, in_features); it is
    transposed here to (in, out) and cast to bf16 exactly once, so the forward
    never re-reads/casts D^2 floats from HBM.
    """
    w = jnp.asarray(w_out_in).T.astype(jnp.bfloat16)          # (in, out) bf16
    d = w.shape[0]
    return dict(
        w=w,
        b=jnp.asarray(b, jnp.float32).reshape(1, d),
        gamma=jnp.asarray(gamma, jnp.float32).reshape(1, d),
        beta=jnp.asarray(beta, jnp.float32).reshape(1, d),
    )


def residual_forward(x, params):
    """x: (B, S, D) float32. params from prepare_params()."""
    B, S, D = x.shape
    rows = B * S
    tm = _pick_tile_rows(rows, D)
    n_tiles = pl.cdiv(rows, tm)           # ragged last tile handled by Pallas

    x2 = x.reshape(rows, D)

    cost = pl.CostEstimate(
        flops=2 * rows * D * D + 8 * rows * D,
        transcendentals=rows,                               # rsqrt per row
        bytes_accessed=rows * D * 4 * 2 + D * D * 2 + 3 * D * 4,
    )

    out = pl.pallas_call(
        residual_kernel,
        out_shape=jax.ShapeDtypeStruct((rows, D), x.dtype),
        grid_spec=pltpu.PrefetchScalarGridSpec(
            num_scalar_prefetch=0,
            grid=(n_tiles,),
            in_specs=[
                pl.BlockSpec((tm, D), lambda i: (i, 0)),    # x rows (pipelined)
                _invariant_spec((D, D)),                    # weight bf16
                _invariant_spec((1, D)),                    # bias
                _invariant_spec((1, D)),                    # ln gamma
                _invariant_spec((1, D)),                    # ln beta
            ],
            out_specs=pl.BlockSpec((tm, D), lambda i: (i, 0)),
        ),
        compiler_params=pltpu.CompilerParams(
            dimension_semantics=("parallel",),
            vmem_limit_bytes=_VMEM_LIMIT_BYTES,
        ),
        cost_estimate=cost,
    )(x2, params["w"], params["b"], params["gamma"], params["beta"])

    return out.reshape(B, S, D)


def residual_reference(x, w_out_in, b, gamma, beta):
    """Pure-JAX reference with the same bf16-operand / f32-accumulate numerics."""
    B, S, D = x.shape
    x2 = x.reshape(-1, D)
    w = jnp.asarray(w_out_in).T.astype(jnp.bfloat16)
    h = jnp.dot(x2.astype(jnp.bfloat16), w, preferred_element_type=jnp.float32) + b
    y = x2 + h
    mean = jnp.mean(y, axis=-1, keepdims=True)
    var = jnp.mean((y - mean) ** 2, axis=-1, keepdims=True)
    out = (y - mean) * jax.lax.rsqrt(var + EPS) * gamma + beta
    return out.reshape(B, S, D)


if __name__ == "__main__":
    B, S, D = 2, 8, 128
    key = jax.random.PRNGKey(0)
    kx, kw, kb = jax.random.split(key, 3)

    x = jax.random.normal(kx, (B, S, D), dtype=jnp.float32)

    # Deterministic parameter init; w is stored in PyTorch nn.Linear layout
    # (out_features, in_features) and transposed once inside prepare_params.
    bound = 1.0 / (D ** 0.5)
    w_pt = jax.random.uniform(kw, (D, D), jnp.float32, -bound, bound)
    b = jax.random.uniform(kb, (D,), jnp.float32, -bound, bound)
    gamma = jnp.ones((D,), jnp.float32)    # nn.LayerNorm defaults
    beta = jnp.zeros((D,), jnp.float32)

    params = prepare_params(w_pt, b, gamma, beta)   # one-time cast/transpose

    fwd = jax.jit(residual_forward)
    out = fwd(x, params)
    jax.block_until_ready(out)

    ref = residual_reference(x, w_pt, b, gamma, beta)
    assert out.shape == (B, S, D)
    assert jnp.allclose(out, ref, atol=2e-3, rtol=2e-3), "mismatch vs reference"

    print("KERNEL_OK")
</pallas_src>

<mosaic_0001>
module attributes {stable_mosaic.version = 11 : i64} {
  func.func @residual_kernel(%arg0: i32, %arg1: memref<16x128xf32, #tpu.memory_space<vmem>>, %arg2: memref<128x128xbf16, #tpu.memory_space<vmem>>, %arg3: memref<1x128xf32, #tpu.memory_space<vmem>>, %arg4: memref<1x128xf32, #tpu.memory_space<vmem>>, %arg5: memref<1x128xf32, #tpu.memory_space<vmem>>, %arg6: memref<16x128xf32, #tpu.memory_space<vmem>>) attributes {dimension_semantics = [#tpu.dimension_semantics<parallel>], iteration_bounds = array<i64: 1>, scalar_prefetch = 0 : i64, scratch_operands = 0 : i64, tpu.core_type = #tpu.core_type<tc>, window_params = [{transform_indices = @transform_0, window_bounds = array<i64: 16, 128>}, {pipeline_mode = #tpu.pipeline_mode<synchronous>, transform_indices = @transform_1, window_bounds = array<i64: 128, 128>}, {pipeline_mode = #tpu.pipeline_mode<synchronous>, transform_indices = @transform_2, window_bounds = array<i64: 1, 128>}, {pipeline_mode = #tpu.pipeline_mode<synchronous>, transform_indices = @transform_3, window_bounds = array<i64: 1, 128>}, {pipeline_mode = #tpu.pipeline_mode<synchronous>, transform_indices = @transform_4, window_bounds = array<i64: 1, 128>}, {transform_indices = @transform_5, window_bounds = array<i64: 16, 128>}]} {
    %c0 = arith.constant 0 : index
    %c0_0 = arith.constant 0 : index
    %0 = vector.load %arg1[%c0, %c0_0] : memref<16x128xf32, #tpu.memory_space<vmem>>, vector<16x128xf32>
    %1 = arith.truncf %0 : vector<16x128xf32> to vector<16x128xbf16>
    %c0_1 = arith.constant 0 : index
    %c0_2 = arith.constant 0 : index
    %2 = vector.load %arg2[%c0_1, %c0_2] : memref<128x128xbf16, #tpu.memory_space<vmem>>, vector<128x128xbf16>
    %cst = arith.constant dense<0.000000e+00> : vector<16x128xf32>
    %3 = tpu.matmul %1, %2, %cst {dimension_numbers = #tpu.dot_dimension_numbers<[1], [0], [0], [1], [0, 0, 1, 1], [], []>} : vector<16x128xbf16>, vector<128x128xbf16>, vector<16x128xf32> -> vector<16x128xf32>
    %c0_3 = arith.constant 0 : index
    %c0_4 = arith.constant 0 : index
    %4 = vector.load %arg3[%c0_3, %c0_4] : memref<1x128xf32, #tpu.memory_space<vmem>>, vector<1x128xf32>
    %5 = vector.broadcast %4 : vector<1x128xf32> to vector<16x128xf32>
    %6 = arith.addf %3, %5 : vector<16x128xf32>
    %7 = arith.addf %0, %6 : vector<16x128xf32>
    %cst_5 = arith.constant dense<0.000000e+00> : vector<16xf32>
    %8 = vector.multi_reduction <add>, %7, %cst_5 [1] : vector<16x128xf32> to vector<16xf32>
    %9 = vector.shape_cast %8 : vector<16xf32> to vector<16x1xf32>
    %cst_6 = arith.constant 1.280000e+02 : f32
    %10 = vector.broadcast %cst_6 : f32 to vector<16x1xf32>
    %11 = arith.divf %9, %10 : vector<16x1xf32>
    %12 = vector.broadcast %11 : vector<16x1xf32> to vector<16x128xf32>
    %13 = arith.subf %7, %12 : vector<16x128xf32>
    %14 = arith.mulf %13, %13 : vector<16x128xf32>
    %cst_7 = arith.constant dense<0.000000e+00> : vector<16xf32>
    %15 = vector.multi_reduction <add>, %14, %cst_7 [1] : vector<16x128xf32> to vector<16xf32>
    %16 = vector.shape_cast %15 : vector<16xf32> to vector<16x1xf32>
    %cst_8 = arith.constant 1.280000e+02 : f32
    %17 = vector.broadcast %cst_8 : f32 to vector<16x1xf32>
    %18 = arith.divf %16, %17 : vector<16x1xf32>
    %cst_9 = arith.constant 9.99999974E-6 : f32
    %19 = vector.broadcast %cst_9 : f32 to vector<16x1xf32>
    %20 = arith.addf %18, %19 : vector<16x1xf32>
    %21 = math.rsqrt %20 : vector<16x1xf32>
    %22 = vector.broadcast %21 : vector<16x1xf32> to vector<16x128xf32>
    %23 = arith.mulf %13, %22 : vector<16x128xf32>
    %c0_10 = arith.constant 0 : index
    %c0_11 = arith.constant 0 : index
    %24 = vector.load %arg4[%c0_10, %c0_11] : memref<1x128xf32, #tpu.memory_space<vmem>>, vector<1x128xf32>
    %25 = vector.broadcast %24 : vector<1x128xf32> to vector<16x128xf32>
    %26 = arith.mulf %23, %25 : vector<16x128xf32>
    %c0_12 = arith.constant 0 : index
    %c0_13 = arith.constant 0 : index
    %27 = vector.load %arg5[%c0_12, %c0_13] : memref<1x128xf32, #tpu.memory_space<vmem>>, vector<1x128xf32>
    %28 = vector.broadcast %27 : vector<1x128xf32> to vector<16x128xf32>
    %29 = arith.addf %26, %28 : vector<16x128xf32>
    %c0_14 = arith.constant 0 : index
    %c0_15 = arith.constant 0 : index
    %30 = vector.load %arg6[%c0_14, %c0_15] : memref<16x128xf32, #tpu.memory_space<vmem>>, vector<16x128xf32>
    tpu.vector_store %arg6[%c0_14, %c0_15], %29 {strides = array<i32>} : memref<16x128xf32, #tpu.memory_space<vmem>>, vector<16x128xf32>,
    return
  }
  func.func @transform_0(%arg0: i32) -> (i32, i32) {
    %c0_i32 = arith.constant 0 : i32
    %c0_i32_0 = arith.constant 0 : i32
    return %arg0, %c0_i32 : i32, i32
  }
  func.func @transform_1(%arg0: i32) -> (i32, i32) {
    %c0_i32 = arith.constant 0 : i32
    %c0_i32_0 = arith.constant 0 : i32
    %c0_i32_1 = arith.constant 0 : i32
    return %c0_i32, %c0_i32_0 : i32, i32
  }
  func.func @transform_2(%arg0: i32) -> (i32, i32) {
    %c0_i32 = arith.constant 0 : i32
    %c0_i32_0 = arith.constant 0 : i32
    %c0_i32_1 = arith.constant 0 : i32
    return %c0_i32, %c0_i32_0 : i32, i32
  }
  func.func @transform_3(%arg0: i32) -> (i32, i32) {
    %c0_i32 = arith.constant 0 : i32
    %c0_i32_0 = arith.constant 0 : i32
    %c0_i32_1 = arith.constant 0 : i32
    return %c0_i32, %c0_i32_0 : i32, i32
  }
  func.func @transform_4(%arg0: i32) -> (i32, i32) {
    %c0_i32 = arith.constant 0 : i32
    %c0_i32_0 = arith.constant 0 : i32
    %c0_i32_1 = arith.constant 0 : i32
    return %c0_i32, %c0_i32_0 : i32, i32
  }
  func.func @transform_5(%arg0: i32) -> (i32, i32) {
    %c0_i32 = arith.constant 0 : i32
    %c0_i32_0 = arith.constant 0 : i32
    return %arg0, %c0_i32 : i32, i32
  }
}

</mosaic_0001>

<llo_original>
// kernel: residual_forward.1
$region0: #{residual_forward.1}
  #allocation0 [shape = 'u32[]', space=smem, size = 0x4, offset = 0x4, fixed_abs, tag = 'smem constant byte address 0x4 - core index']
  #allocation1 [shape = 'u32[144,128]{1,0:T(1,128)}', space=vmem, size = 0x12000, scoped, tag = 'internal scratch']
  %s0 = inlined_call_operand.hbm [shape: f32[16,128], index: 0, kind: input, shape index: {}]
  %s1 = inlined_call_operand.hbm [shape: bf16[128,128], index: 1, kind: input, shape index: {}]
  %s2 = inlined_call_operand.vmem [shape: f32[1,128], index: 2, kind: input, shape index: {}]
  %s3 = inlined_call_operand.vmem [shape: f32[1,128], index: 3, kind: input, shape index: {}]
  %s4 = inlined_call_operand.vmem [shape: f32[1,128], index: 4, kind: input, shape index: {}]
  %s5 = inlined_call_operand.hbm [shape: f32[16,128], index: 5, kind: output, shape index: {}]
  %s6 = sld [smem:[#allocation0]]
  $region38: #{residual_forward.1} parent=0
    _
  %s8 = ssub.s32 1, %s6
  %s9 = scalar_select 0, %s8, %s6
  $region1: #{residual_forward.1} parent=0
    #allocation2 [shape = 'u8[8192]{0}', space=vmem, size = 0x2000, scoped, tag = 'input window, operand 0, single buffered']
    #allocation3 [shape = 's32[1]{0}', space=sflag, size = 0x4, scoped, tag = 'scoped memory for residual_forward.1']
    #allocation4 [shape = 's32[1]{0}', space=sflag, size = 0x4, scoped, tag = 'scoped memory for residual_forward.1']
    #allocation5 [shape = 'u8[32768]{0}', space=vmem, size = 0x8000, scoped, tag = 'input window, operand 1, single buffered']
    #allocation6 [shape = 's32[1]{0}', space=sflag, size = 0x4, scoped, tag = 'scoped memory for residual_forward.1']
    #allocation7 [shape = 'u8[8192]{0}', space=vmem, size = 0x2000, scoped, tag = 'output window, operand 0, single buffered']
    %10 = vsyncpa [#allocation3], 0
    %11 = vsyncpa [#allocation6], 0
    %12 = vsyncpa [#allocation4], 0
    // Predicated region
    $region2: #{residual_forward.1} parent=1 // pred_check
      _
    $region3: #{residual_forward.1} parent=1 // pred_check_branch
      %14 = sbr.rel (0) target = $region5
    $region4: #{residual_forward.1} parent=1 // pred_region
      %s16 = ssub.s32 256, 256
      %17 = vsyncadd [#allocation3], %s16
      %s18 = sshll.u32 [#allocation2], 4
      %s19 = int_to_ptr.vmem [resolvable:$true] %s18
      %24 = dma.hbm_to_vmem [thread:$0]  %s0, 256, %s19, [#allocation3], 128, 128, 8
    $region5: #{residual_forward.1} parent=1 // pred_fallthru
      _
    // Predicated region
    $region6: #{residual_forward.1} parent=1 // pred_check
      _
    $region7: #{residual_forward.1} parent=1 // pred_check_branch
      %26 = sbr.rel (0) target = $region9
    $region8: #{residual_forward.1} parent=1 // pred_region
      %s28 = ssub.s32 1024, 1024
      %29 = vsyncadd [#allocation6], %s28
      %s30 = sshll.u32 [#allocation5], 4
      %s31 = int_to_ptr.vmem [resolvable:$true] %s30
      %36 = dma.hbm_to_vmem [thread:$0]  %s1, 1024, %s31, [#allocation6], 64, 64, 4
    $region9: #{residual_forward.1} parent=1 // pred_fallthru
      _
    // Predicated region
    $region10: #{residual_forward.1} parent=1 // pred_check
      _
    $region11: #{residual_forward.1} parent=1 // pred_check_branch
      %38 = sbr.rel (0) target = $region13
    $region12: #{residual_forward.1} parent=1 // pred_region
      _
    $region13: #{residual_forward.1} parent=1 // pred_fallthru
      _
    // Predicated region
    $region14: #{residual_forward.1} parent=1 // pred_check
      _
    $region15: #{residual_forward.1} parent=1 // pred_check_branch
      %40 = sbr.rel (0) target = $region17
    $region16: #{residual_forward.1} parent=1 // pred_region
      _
    $region17: #{residual_forward.1} parent=1 // pred_fallthru
      _
    // Predicated region
    $region18: #{residual_forward.1} parent=1 // pred_check
      _
    $region19: #{residual_forward.1} parent=1 // pred_check_branch
      %42 = sbr.rel (0) target = $region21
    $region20: #{residual_forward.1} parent=1 // pred_region
      _
    $region21: #{residual_forward.1} parent=1 // pred_fallthru
      _
    // Predicated region
    $region22: #{residual_forward.1} parent=1 // pred_check
      _
    $region23: #{residual_forward.1} parent=1 // pred_check_branch
      %44 = sbr.rel (0) target = $region25
    $region24: #{residual_forward.1} parent=1 // pred_region
      %45 = dma.done [#allocation3], 256
    $region25: #{residual_forward.1} parent=1 // pred_fallthru
      _
    // Predicated region
    $region26: #{residual_forward.1} parent=1 // pred_check
      _
    $region27: #{residual_forward.1} parent=1 // pred_check_branch
      %47 = sbr.rel (0) target = $region29
    $region28: #{residual_forward.1} parent=1 // pred_region
      %48 = dma.done [#allocation6], 1024
    $region29: #{residual_forward.1} parent=1 // pred_fallthru
      _
    %v50 = vld [vmem:[#allocation2] sm:$0xff]
    %v51 = vld [vmem:[#allocation2 + $0x8] sm:$0xff]
    %v52 = vpack.c.bf16 %v51, %v50
    %v53 = vld [vmem:[#allocation5] sm:$0xf]
    %v54 = vld [vmem:[#allocation5 + $0x4] sm:$0xf]
    %v55 = vld [vmem:[#allocation5 + $0x8] sm:$0xf]
    %v56 = vld [vmem:[#allocation5 + $0xc] sm:$0xf]
    %v57 = vld [vmem:[#allocation5 + $0x10] sm:$0xf]
    %v58 = vld [vmem:[#allocation5 + $0x14] sm:$0xf]
    %v59 = vld [vmem:[#allocation5 + $0x18] sm:$0xf]
    %v60 = vld [vmem:[#allocation5 + $0x1c] sm:$0xf]
    %v61 = vld [vmem:[#allocation5 + $0x20] sm:$0xf]
    %v62 = vld [vmem:[#allocation5 + $0x24] sm:$0xf]
    %v63 = vld [vmem:[#allocation5 + $0x28] sm:$0xf]
    %v64 = vld [vmem:[#allocation5 + $0x2c] sm:$0xf]
    %v65 = vld [vmem:[#allocation5 + $0x30] sm:$0xf]
    %v66 = vld [vmem:[#allocation5 + $0x34] sm:$0xf]
    %v67 = vld [vmem:[#allocation5 + $0x38] sm:$0xf]
    %v68 = vld [vmem:[#allocation5 + $0x3c] sm:$0xf]
    %v69 = vld [vmem:[%s2] sm:$0x1]
    %v71 = vlaneseq
    %v72 = vshrl.u32 %v71, 7
    %v73 = vsub.s32 0, %v72
    %v74 = vrot.slane %v69, %v73
    %v92 = vunpack.c.l.b16 %v53
    %v93 = vunpack.c.l.b16 %v54
    %v94 = vunpack.c.l.b16 %v55
    %v95 = vunpack.c.l.b16 %v56
    %v96 = vunpack.c.l.b16 %v57
    %v97 = vunpack.c.l.b16 %v58
    %v98 = vunpack.c.l.b16 %v59
    %v99 = vunpack.c.l.b16 %v60
    %v100 = vunpack.c.l.b16 %v61
    %v101 = vunpack.c.l.b16 %v62
    %v102 = vunpack.c.l.b16 %v63
    %v103 = vunpack.c.l.b16 %v64
    %v104 = vunpack.c.l.b16 %v65
    %v105 = vunpack.c.l.b16 %v66
    %v106 = vunpack.c.l.b16 %v67
    %v107 = vunpack.c.l.b16 %v68
    %v108 = vpack.c.b16 %v93, %v92
    %v109 = vpack.c.b16 %v95, %v94
    %v110 = vpack.c.b16 %v97, %v96
    %v111 = vpack.c.b16 %v99, %v98
    %v112 = vpack.c.b16 %v101, %v100
    %v113 = vpack.c.b16 %v103, %v102
    %v114 = vpack.c.b16 %v105, %v104
    %v115 = vpack.c.b16 %v107, %v106
    %124 = vmatprep.subr.bf16.mxu0 0
    %125 = vmatpush1.bf16.msra.mxu0 %v108
    %126 = vmatprep.subr.bf16.mxu0 0
    %127 = vmatpush1.bf16.msra.mxu0 %v109
    %128 = vmatprep.subr.bf16.mxu0 0
    %129 = vmatpush1.bf16.msra.mxu0 %v110
    %130 = vmatprep.subr.bf16.mxu0 0
    %131 = vmatpush1.bf16.msra.mxu0 %v111
    %132 = vmatprep.subr.bf16.mxu0 0
    %133 = vmatpush1.bf16.msra.mxu0 %v112
    %134 = vmatprep.subr.bf16.mxu0 0
    %135 = vmatpush1.bf16.msra.mxu0 %v113
    %136 = vmatprep.subr.bf16.mxu0 0
    %137 = vmatpush1.bf16.msra.mxu0 %v114
    %138 = vmatprep.subr.bf16.mxu0 0
    %139 = vmatpush1.bf16.msra.mxu0 %v115
    %140 = vmatprep.subr.bf16.mxu0 0
    %141 = vmatpush1.bf16.msra.mxu0 0
    %142 = vmatprep.subr.bf16.mxu0 0
    %143 = vmatpush1.bf16.msra.mxu0 0
    %144 = vmatprep.subr.bf16.mxu0 0
    %145 = vmatpush1.bf16.msra.mxu0 0
    %146 = vmatprep.subr.bf16.mxu0 0
    %147 = vmatpush1.bf16.msra.mxu0 0
    %148 = vmatprep.subr.bf16.mxu0 0
    %149 = vmatpush1.bf16.msra.mxu0 0
    %150 = vmatprep.subr.bf16.mxu0 0
    %151 = vmatpush1.bf16.msra.mxu0 0
    %152 = vmatprep.subr.bf16.mxu0 0
    %153 = vmatpush1.bf16.msra.mxu0 0
    %154 = vmatprep.subr.bf16.mxu0 0
    %155 = vmatpush1.bf16.msra.mxu0 0
    %156 = vmatprep.mubr.bf16.mxu0 0
    %157 = vmatmul.mubr.bf16.gmra.mrb[0].mxu0 %v52
    %v158 = vpop.f32.mrb[0].mxu0
    %v159 = vadd.f32 %v74, %v158
    %v160 = vpop.f32.mrb[0].mxu0
    %v161 = vpop.f32.mrb[0].mxu0
    %v162 = vadd.f32 %v74, %v161
    %v163 = vpop.f32.mrb[0].mxu0
    %164 = vdwg.mxu0
    %v165 = vadd.f32 %v50, %v159
    %v166 = vadd.f32 %v51, %v162
    %167 = vadd.xlane.f32.xlu0 %v165
    %v168 = vpop.xlane.xlu0 %167
    %169 = vadd.xlane.f32.xlu0 %v166
    %v170 = vpop.xlane.xlu0 %169
    %v171 = vrcp.pop 128.0
    %v172 = vmul.f32 %v168, %v171
    %v173 = vmul.f32 %v170, %v171
    %v174 = vsub.f32 %v165, %v172
    %v175 = vsub.f32 %v166, %v173
    %v176 = vmul.f32 %v174, %v174
    %v177 = vmul.f32 %v175, %v175
    %178 = vadd.xlane.f32.xlu0 %v176
    %v179 = vpop.xlane.xlu0 %178
    %180 = vadd.xlane.f32.xlu0 %v177
    %v181 = vpop.xlane.xlu0 %180
    %v182 = vmul.f32 %v179, %v171
    %v183 = vmul.f32 %v181, %v171
    %v184 = vadd.f32 %v182, 1e-05
    %v185 = vadd.f32 %v183, 1e-05
    %v186 = vrsqrt.pop %v184
    %v187 = vrsqrt.pop %v185
    %v188 = vmul.f32 %v174, %v186
    %v189 = vmul.f32 %v175, %v187
    %v190 = vld [vmem:[%s3] sm:$0x1]
    %v192 = vlaneseq
    %v193 = vshrl.u32 %v192, 7
    %v194 = vsub.s32 0, %v193
    %v195 = vrot.slane %v190, %v194
    %v197 = vmul.f32 %v188, %v195
    %v198 = vmul.f32 %v189, %v195
    %v199 = vld [vmem:[%s4] sm:$0x1]
    %v201 = vlaneseq
    %v202 = vshrl.u32 %v201, 7
    %v203 = vsub.s32 0, %v202
    %v204 = vrot.slane %v199, %v203
    %v206 = vadd.f32 %v197, %v204
    %v207 = vadd.f32 %v198, %v204
    %208 = vst [vmem:[#allocation7] sm:$0xff] %v206
    %209 = vst [vmem:[#allocation7 + $0x8] sm:$0xff] %v207
    // Predicated region
    $region30: #{residual_forward.1} parent=1 // pred_check
      _
    $region31: #{residual_forward.1} parent=1 // pred_check_branch
      %211 = sbr.rel (0) target = $region33
    $region32: #{residual_forward.1} parent=1 // pred_region
      %s213 = ssub.s32 256, 256
      %214 = vsyncadd [#allocation4], %s213
      %s215 = sshll.u32 [#allocation7], 4
      %s216 = int_to_ptr.vmem [resolvable:$true] %s215
      %221 = dma.vmem_to_hbm [thread:$0]  %s216, 256, %s5, [#allocation4], 128, 128, 8
    $region33: #{residual_forward.1} parent=1 // pred_fallthru
      _
    // Predicated region
    $region34: #{residual_forward.1} parent=1 // pred_check
      _
    $region35: #{residual_forward.1} parent=1 // pred_check_branch
      %223 = sbr.rel (0) target = $region37
    $region36: #{residual_forward.1} parent=1 // pred_region
      %224 = dma.done [#allocation4], 256
    $region37: #{residual_forward.1} parent=1 // pred_fallthru
      _
    %225 = vsyncpa [#allocation3], 1
    %226 = vsyncpa [#allocation6], 1
    %227 = vsyncpa [#allocation4], 1

</llo_original>
